<compile_context>
chip_gen: v5e
topology: v5e:2x2
jax: 0.10.0
libtpu: 0.0.40
codegen_flags: <defaults>
</compile_context>

<pallas_src>
import functools
import math

import jax
import jax.numpy as jnp
from jax.experimental import pallas as pl
from jax.experimental.pallas import tpu as pltpu

THRESHOLD = 1.0


def snn_leaky_kernel(x_ref, w1_ref, b1_ref, w2_ref, b2_ref,
                     mem2_out_ref, spk2_out_ref, spk1_buf,
                     *, beta, nb_steps, batch, num_hidden, num_outputs):
    f32 = jnp.float32
    B, T = batch, nb_steps

    # ---- Phase 1: hoisted layer-1 matmul for ALL timesteps (one MXU call,
    # M = B*T rows instead of T calls with M = B).
    cur1_all = (jnp.dot(x_ref[...], w1_ref[...], preferred_element_type=f32)
                + b1_ref[...])                                   # (B*T, nh)
    cur1_all = cur1_all.reshape(B, T, num_hidden)                # (B, T, nh)

    # ---- Phase 2a: layer-1 LIF recurrence (pure VPU), fully unrolled.
    # reset1_t == spk1_{t-1} (same compare against the same membrane), so the
    # previous spike is carried instead of recomputing compare+cast per step.
    mem1 = jnp.zeros((B, num_hidden), f32)
    spk1_prev = jnp.zeros((B, num_hidden), f32)                  # reset at t=0 is 0
    for t in range(T):
        mem1 = beta * mem1 + cur1_all[:, t, :] - spk1_prev * THRESHOLD
        spk1 = (mem1 > THRESHOLD).astype(f32)
        spk1_buf[t * B:(t + 1) * B, :] = spk1                    # t-major rows
        spk1_prev = spk1

    # ---- Phase 2b: hoisted layer-2 matmul over all steps (single MXU call,
    # single b2 broadcast). Rows are t-major: row t*B + b.
    cur2_all = (jnp.dot(spk1_buf[...], w2_ref[...], preferred_element_type=f32)
                + b2_ref[...])                                   # (T*B, no)

    # ---- Phase 2c: layer-2 LIF recurrence (pure VPU), fully unrolled, with
    # the same reset-reuses-previous-spike shortening of the serial chain.
    mem2 = jnp.zeros((B, num_outputs), f32)
    spk2_prev = jnp.zeros((B, num_outputs), f32)
    mem2_steps = []
    spk2_steps = []
    for t in range(T):
        cur2 = cur2_all[t * B:(t + 1) * B, :]                    # (B, no), static slice
        mem2 = beta * mem2 + cur2 - spk2_prev * THRESHOLD
        spk2 = (mem2 > THRESHOLD).astype(f32)
        mem2_steps.append(mem2)
        spk2_steps.append(spk2)
        spk2_prev = spk2

    # ---- Phase 3: single lane-dense writeback. Layout [b, t*no + o] is the
    # row-major reshape of (B, T, no), so the wrapper reshape back is free.
    mem2_out_ref[...] = jnp.concatenate(mem2_steps, axis=-1)     # (B, T*no)
    spk2_out_ref[...] = jnp.concatenate(spk2_steps, axis=-1)     # (B, T*no)


def snn_leaky_forward(x, w1, b1, w2, b2, beta):
    """x: (batch, nb_steps, H, W). Returns (mem2_rec, spk2_rec), each (B, T, num_outputs)."""
    B, T = x.shape[0], x.shape[1]
    num_inputs = x.shape[-2] * x.shape[-1]
    num_hidden = w1.shape[1]
    num_outputs = w2.shape[1]

    # Free reshapes only -- no transpose / extra HBM pass over the input.
    x2d = x.reshape(B * T, num_inputs)
    b1_2d = b1.reshape(1, num_hidden)
    b2_2d = b2.reshape(1, num_outputs)

    kernel = functools.partial(
        snn_leaky_kernel, beta=float(beta), nb_steps=T, batch=B,
        num_hidden=num_hidden, num_outputs=num_outputs)

    flops = 2 * B * T * (num_inputs * num_hidden + num_hidden * num_outputs)
    bytes_accessed = 4 * (B * T * num_inputs + num_inputs * num_hidden + num_hidden
                          + num_hidden * num_outputs + num_outputs
                          + 2 * B * T * num_outputs)

    vmem = pl.BlockSpec(memory_space=pltpu.MemorySpace.VMEM)
    mem2_flat, spk2_flat = pl.pallas_call(
        kernel,
        out_shape=(
            jax.ShapeDtypeStruct((B, T * num_outputs), jnp.float32),
            jax.ShapeDtypeStruct((B, T * num_outputs), jnp.float32),
        ),
        in_specs=[vmem, vmem, vmem, vmem, vmem],
        out_specs=(vmem, vmem),
        scratch_shapes=[pltpu.VMEM((T * B, num_hidden), jnp.float32)],
        cost_estimate=pl.CostEstimate(flops=flops, transcendentals=0,
                                      bytes_accessed=bytes_accessed),
    )(x2d, w1, b1_2d, w2, b2_2d)

    # Back to PyTorch convention: (batch, nb_steps, num_outputs) -- free reshape.
    return (mem2_flat.reshape(B, T, num_outputs),
            spk2_flat.reshape(B, T, num_outputs))


def _reference(x, w1, b1, w2, b2, beta):
    B, T = x.shape[0], x.shape[1]
    xf = x.reshape(B, T, -1)
    mem1 = jnp.zeros((B, w1.shape[1]), jnp.float32)
    mem2 = jnp.zeros((B, w2.shape[1]), jnp.float32)
    mems, spks = [], []
    for t in range(T):
        cur1 = xf[:, t] @ w1 + b1
        r1 = (mem1 > THRESHOLD).astype(jnp.float32)
        mem1 = beta * mem1 + cur1 - r1 * THRESHOLD
        spk1 = (mem1 > THRESHOLD).astype(jnp.float32)
        cur2 = spk1 @ w2 + b2
        r2 = (mem2 > THRESHOLD).astype(jnp.float32)
        mem2 = beta * mem2 + cur2 - r2 * THRESHOLD
        spk2 = (mem2 > THRESHOLD).astype(jnp.float32)
        mems.append(mem2)
        spks.append(spk2)
    return jnp.stack(mems, axis=1), jnp.stack(spks, axis=1)


if __name__ == "__main__":
    # Small shapes consistent with the module's forward:
    batch, nb_steps, H, W = 2, 8, 16, 16
    num_inputs = H * W        # 256
    num_hidden = 32
    num_outputs = 16
    time_step, tau_mem = 0.01, 0.1
    beta = float(math.exp(-time_step / tau_mem))

    key = jax.random.PRNGKey(0)
    kx, kw1, kb1, kw2, kb2 = jax.random.split(key, 5)

    # Deterministic nn.Linear-style init (uniform +/- 1/sqrt(fan_in)); weights
    # stored as (in, out) == PyTorch weight.T
    lim1 = 1.0 / math.sqrt(num_inputs)
    lim2 = 1.0 / math.sqrt(num_hidden)
    w1 = jax.random.uniform(kw1, (num_inputs, num_hidden), jnp.float32, -lim1, lim1)
    b1 = jax.random.uniform(kb1, (num_hidden,), jnp.float32, -lim1, lim1)
    w2 = jax.random.uniform(kw2, (num_hidden, num_outputs), jnp.float32, -lim2, lim2)
    b2 = jax.random.uniform(kb2, (num_outputs,), jnp.float32, -lim2, lim2)

    # Input scaled so some neurons actually spike.
    x = jax.random.uniform(kx, (batch, nb_steps, H, W), jnp.float32, 0.0, 1.0)

    mem2_rec, spk2_rec = snn_leaky_forward(x, w1, b1, w2, b2, beta)
    jax.block_until_ready((mem2_rec, spk2_rec))

    mem_ref, spk_ref = _reference(x, w1, b1, w2, b2, beta)
    assert mem2_rec.shape == (batch, nb_steps, num_outputs)
    assert spk2_rec.shape == (batch, nb_steps, num_outputs)
    assert jnp.allclose(mem2_rec, mem_ref, atol=1e-5, rtol=1e-5)
    assert jnp.allclose(spk2_rec, spk_ref, atol=1e-5, rtol=1e-5)

    print("KERNEL_OK")
</pallas_src>

<mosaic_0001>
module attributes {stable_mosaic.version = 11 : i64} {
  func.func @snn_leaky_kernel(%arg0: memref<16x256xf32, #tpu.memory_space<vmem>>, %arg1: memref<256x32xf32, #tpu.memory_space<vmem>>, %arg2: memref<1x32xf32, #tpu.memory_space<vmem>>, %arg3: memref<32x16xf32, #tpu.memory_space<vmem>>, %arg4: memref<1x16xf32, #tpu.memory_space<vmem>>, %arg5: memref<2x128xf32, #tpu.memory_space<vmem>>, %arg6: memref<2x128xf32, #tpu.memory_space<vmem>>, %arg7: memref<16x32xf32, #tpu.memory_space<vmem>>) attributes {dimension_semantics = [], scalar_prefetch = 0 : i64, scratch_operands = 1 : i64, tpu.core_type = #tpu.core_type<tc>} {
    %c0 = arith.constant 0 : index
    %c0_0 = arith.constant 0 : index
    %0 = vector.load %arg0[%c0, %c0_0] : memref<16x256xf32, #tpu.memory_space<vmem>>, vector<16x256xf32>
    %c0_1 = arith.constant 0 : index
    %c0_2 = arith.constant 0 : index
    %1 = vector.load %arg1[%c0_1, %c0_2] : memref<256x32xf32, #tpu.memory_space<vmem>>, vector<256x32xf32>
    %cst = arith.constant dense<0.000000e+00> : vector<16x32xf32>
    %2 = tpu.matmul %0, %1, %cst {dimension_numbers = #tpu.dot_dimension_numbers<[1], [0], [0], [1], [0, 0, 1, 1], [], []>} : vector<16x256xf32>, vector<256x32xf32>, vector<16x32xf32> -> vector<16x32xf32>
    %c0_3 = arith.constant 0 : index
    %c0_4 = arith.constant 0 : index
    %3 = vector.load %arg2[%c0_3, %c0_4] : memref<1x32xf32, #tpu.memory_space<vmem>>, vector<1x32xf32>
    %4 = vector.broadcast %3 : vector<1x32xf32> to vector<16x32xf32>
    %5 = arith.addf %2, %4 : vector<16x32xf32>
    %6 = vector.shape_cast %5 : vector<16x32xf32> to vector<2x8x32xf32>
    %cst_5 = arith.constant 0.000000e+00 : f32
    %7 = vector.broadcast %cst_5 : f32 to vector<2x32xf32>
    %cst_6 = arith.constant 0.000000e+00 : f32
    %8 = vector.broadcast %cst_6 : f32 to vector<2x32xf32>
    %cst_7 = arith.constant 0.904837429 : f32
    %9 = vector.broadcast %cst_7 : f32 to vector<2x32xf32>
    %10 = arith.mulf %9, %7 : vector<2x32xf32>
    %11 = vector.extract_strided_slice %6 {offsets = [0, 0, 0], sizes = [2, 1, 32], strides = [1, 1, 1]} : vector<2x8x32xf32> to vector<2x1x32xf32>
    %12 = vector.shape_cast %11 : vector<2x1x32xf32> to vector<2x32xf32>
    %13 = arith.addf %10, %12 : vector<2x32xf32>
    %cst_8 = arith.constant 1.000000e+00 : f32
    %14 = vector.broadcast %cst_8 : f32 to vector<2x32xf32>
    %15 = arith.mulf %8, %14 : vector<2x32xf32>
    %16 = arith.subf %13, %15 : vector<2x32xf32>
    %cst_9 = arith.constant 1.000000e+00 : f32
    %17 = vector.broadcast %cst_9 : f32 to vector<2x32xf32>
    %18 = arith.cmpf ogt, %16, %17 : vector<2x32xf32>
    %19 = arith.extui %18 : vector<2x32xi1> to vector<2x32xi32>
    %20 = arith.sitofp %19 : vector<2x32xi32> to vector<2x32xf32>
    %c0_10 = arith.constant 0 : index
    %c0_11 = arith.constant 0 : index
    %21 = vector.load %arg7[%c0_10, %c0_11] : memref<16x32xf32, #tpu.memory_space<vmem>>, vector<2x32xf32>
    tpu.vector_store %arg7[%c0_10, %c0_11], %20 {strides = array<i32>} : memref<16x32xf32, #tpu.memory_space<vmem>>, vector<2x32xf32>,
    %cst_12 = arith.constant 0.904837429 : f32
    %22 = vector.broadcast %cst_12 : f32 to vector<2x32xf32>
    %23 = arith.mulf %22, %16 : vector<2x32xf32>
    %24 = vector.extract_strided_slice %6 {offsets = [0, 1, 0], sizes = [2, 1, 32], strides = [1, 1, 1]} : vector<2x8x32xf32> to vector<2x1x32xf32>
    %25 = vector.shape_cast %24 : vector<2x1x32xf32> to vector<2x32xf32>
    %26 = arith.addf %23, %25 : vector<2x32xf32>
    %cst_13 = arith.constant 1.000000e+00 : f32
    %27 = vector.broadcast %cst_13 : f32 to vector<2x32xf32>
    %28 = arith.mulf %20, %27 : vector<2x32xf32>
    %29 = arith.subf %26, %28 : vector<2x32xf32>
    %cst_14 = arith.constant 1.000000e+00 : f32
    %30 = vector.broadcast %cst_14 : f32 to vector<2x32xf32>
    %31 = arith.cmpf ogt, %29, %30 : vector<2x32xf32>
    %32 = arith.extui %31 : vector<2x32xi1> to vector<2x32xi32>
    %33 = arith.sitofp %32 : vector<2x32xi32> to vector<2x32xf32>
    %c2 = arith.constant 2 : index
    %c0_15 = arith.constant 0 : index
    %34 = vector.load %arg7[%c2, %c0_15] : memref<16x32xf32, #tpu.memory_space<vmem>>, vector<2x32xf32>
    tpu.vector_store %arg7[%c2, %c0_15], %33 {strides = array<i32>} : memref<16x32xf32, #tpu.memory_space<vmem>>, vector<2x32xf32>,
    %cst_16 = arith.constant 0.904837429 : f32
    %35 = vector.broadcast %cst_16 : f32 to vector<2x32xf32>
    %36 = arith.mulf %35, %29 : vector<2x32xf32>
    %37 = vector.extract_strided_slice %6 {offsets = [0, 2, 0], sizes = [2, 1, 32], strides = [1, 1, 1]} : vector<2x8x32xf32> to vector<2x1x32xf32>
    %38 = vector.shape_cast %37 : vector<2x1x32xf32> to vector<2x32xf32>
    %39 = arith.addf %36, %38 : vector<2x32xf32>
    %cst_17 = arith.constant 1.000000e+00 : f32
    %40 = vector.broadcast %cst_17 : f32 to vector<2x32xf32>
    %41 = arith.mulf %33, %40 : vector<2x32xf32>
    %42 = arith.subf %39, %41 : vector<2x32xf32>
    %cst_18 = arith.constant 1.000000e+00 : f32
    %43 = vector.broadcast %cst_18 : f32 to vector<2x32xf32>
    %44 = arith.cmpf ogt, %42, %43 : vector<2x32xf32>
    %45 = arith.extui %44 : vector<2x32xi1> to vector<2x32xi32>
    %46 = arith.sitofp %45 : vector<2x32xi32> to vector<2x32xf32>
    %c4 = arith.constant 4 : index
    %c0_19 = arith.constant 0 : index
    %47 = vector.load %arg7[%c4, %c0_19] : memref<16x32xf32, #tpu.memory_space<vmem>>, vector<2x32xf32>
    tpu.vector_store %arg7[%c4, %c0_19], %46 {strides = array<i32>} : memref<16x32xf32, #tpu.memory_space<vmem>>, vector<2x32xf32>,
    %cst_20 = arith.constant 0.904837429 : f32
    %48 = vector.broadcast %cst_20 : f32 to vector<2x32xf32>
    %49 = arith.mulf %48, %42 : vector<2x32xf32>
    %50 = vector.extract_strided_slice %6 {offsets = [0, 3, 0], sizes = [2, 1, 32], strides = [1, 1, 1]} : vector<2x8x32xf32> to vector<2x1x32xf32>
    %51 = vector.shape_cast %50 : vector<2x1x32xf32> to vector<2x32xf32>
    %52 = arith.addf %49, %51 : vector<2x32xf32>
    %cst_21 = arith.constant 1.000000e+00 : f32
    %53 = vector.broadcast %cst_21 : f32 to vector<2x32xf32>
    %54 = arith.mulf %46, %53 : vector<2x32xf32>
    %55 = arith.subf %52, %54 : vector<2x32xf32>
    %cst_22 = arith.constant 1.000000e+00 : f32
    %56 = vector.broadcast %cst_22 : f32 to vector<2x32xf32>
    %57 = arith.cmpf ogt, %55, %56 : vector<2x32xf32>
    %58 = arith.extui %57 : vector<2x32xi1> to vector<2x32xi32>
    %59 = arith.sitofp %58 : vector<2x32xi32> to vector<2x32xf32>
    %c6 = arith.constant 6 : index
    %c0_23 = arith.constant 0 : index
    %60 = vector.load %arg7[%c6, %c0_23] : memref<16x32xf32, #tpu.memory_space<vmem>>, vector<2x32xf32>
    tpu.vector_store %arg7[%c6, %c0_23], %59 {strides = array<i32>} : memref<16x32xf32, #tpu.memory_space<vmem>>, vector<2x32xf32>,
    %cst_24 = arith.constant 0.904837429 : f32
    %61 = vector.broadcast %cst_24 : f32 to vector<2x32xf32>
    %62 = arith.mulf %61, %55 : vector<2x32xf32>
    %63 = vector.extract_strided_slice %6 {offsets = [0, 4, 0], sizes = [2, 1, 32], strides = [1, 1, 1]} : vector<2x8x32xf32> to vector<2x1x32xf32>
    %64 = vector.shape_cast %63 : vector<2x1x32xf32> to vector<2x32xf32>
    %65 = arith.addf %62, %64 : vector<2x32xf32>
    %cst_25 = arith.constant 1.000000e+00 : f32
    %66 = vector.broadcast %cst_25 : f32 to vector<2x32xf32>
    %67 = arith.mulf %59, %66 : vector<2x32xf32>
    %68 = arith.subf %65, %67 : vector<2x32xf32>
    %cst_26 = arith.constant 1.000000e+00 : f32
    %69 = vector.broadcast %cst_26 : f32 to vector<2x32xf32>
    %70 = arith.cmpf ogt, %68, %69 : vector<2x32xf32>
    %71 = arith.extui %70 : vector<2x32xi1> to vector<2x32xi32>
    %72 = arith.sitofp %71 : vector<2x32xi32> to vector<2x32xf32>
    %c8 = arith.constant 8 : index
    %c0_27 = arith.constant 0 : index
    %73 = vector.load %arg7[%c8, %c0_27] : memref<16x32xf32, #tpu.memory_space<vmem>>, vector<2x32xf32>
    tpu.vector_store %arg7[%c8, %c0_27], %72 {strides = array<i32>} : memref<16x32xf32, #tpu.memory_space<vmem>>, vector<2x32xf32>,
    %cst_28 = arith.constant 0.904837429 : f32
    %74 = vector.broadcast %cst_28 : f32 to vector<2x32xf32>
    %75 = arith.mulf %74, %68 : vector<2x32xf32>
    %76 = vector.extract_strided_slice %6 {offsets = [0, 5, 0], sizes = [2, 1, 32], strides = [1, 1, 1]} : vector<2x8x32xf32> to vector<2x1x32xf32>
    %77 = vector.shape_cast %76 : vector<2x1x32xf32> to vector<2x32xf32>
    %78 = arith.addf %75, %77 : vector<2x32xf32>
    %cst_29 = arith.constant 1.000000e+00 : f32
    %79 = vector.broadcast %cst_29 : f32 to vector<2x32xf32>
    %80 = arith.mulf %72, %79 : vector<2x32xf32>
    %81 = arith.subf %78, %80 : vector<2x32xf32>
    %cst_30 = arith.constant 1.000000e+00 : f32
    %82 = vector.broadcast %cst_30 : f32 to vector<2x32xf32>
    %83 = arith.cmpf ogt, %81, %82 : vector<2x32xf32>
    %84 = arith.extui %83 : vector<2x32xi1> to vector<2x32xi32>
    %85 = arith.sitofp %84 : vector<2x32xi32> to vector<2x32xf32>
    %c10 = arith.constant 10 : index
    %c0_31 = arith.constant 0 : index
    %86 = vector.load %arg7[%c10, %c0_31] : memref<16x32xf32, #tpu.memory_space<vmem>>, vector<2x32xf32>
    tpu.vector_store %arg7[%c10, %c0_31], %85 {strides = array<i32>} : memref<16x32xf32, #tpu.memory_space<vmem>>, vector<2x32xf32>,
    %cst_32 = arith.constant 0.904837429 : f32
    %87 = vector.broadcast %cst_32 : f32 to vector<2x32xf32>
    %88 = arith.mulf %87, %81 : vector<2x32xf32>
    %89 = vector.extract_strided_slice %6 {offsets = [0, 6, 0], sizes = [2, 1, 32], strides = [1, 1, 1]} : vector<2x8x32xf32> to vector<2x1x32xf32>
    %90 = vector.shape_cast %89 : vector<2x1x32xf32> to vector<2x32xf32>
    %91 = arith.addf %88, %90 : vector<2x32xf32>
    %cst_33 = arith.constant 1.000000e+00 : f32
    %92 = vector.broadcast %cst_33 : f32 to vector<2x32xf32>
    %93 = arith.mulf %85, %92 : vector<2x32xf32>
    %94 = arith.subf %91, %93 : vector<2x32xf32>
    %cst_34 = arith.constant 1.000000e+00 : f32
    %95 = vector.broadcast %cst_34 : f32 to vector<2x32xf32>
    %96 = arith.cmpf ogt, %94, %95 : vector<2x32xf32>
    %97 = arith.extui %96 : vector<2x32xi1> to vector<2x32xi32>
    %98 = arith.sitofp %97 : vector<2x32xi32> to vector<2x32xf32>
    %c12 = arith.constant 12 : index
    %c0_35 = arith.constant 0 : index
    %99 = vector.load %arg7[%c12, %c0_35] : memref<16x32xf32, #tpu.memory_space<vmem>>, vector<2x32xf32>
    tpu.vector_store %arg7[%c12, %c0_35], %98 {strides = array<i32>} : memref<16x32xf32, #tpu.memory_space<vmem>>, vector<2x32xf32>,
    %cst_36 = arith.constant 0.904837429 : f32
    %100 = vector.broadcast %cst_36 : f32 to vector<2x32xf32>
    %101 = arith.mulf %100, %94 : vector<2x32xf32>
    %102 = vector.extract_strided_slice %6 {offsets = [0, 7, 0], sizes = [2, 1, 32], strides = [1, 1, 1]} : vector<2x8x32xf32> to vector<2x1x32xf32>
    %103 = vector.shape_cast %102 : vector<2x1x32xf32> to vector<2x32xf32>
    %104 = arith.addf %101, %103 : vector<2x32xf32>
    %cst_37 = arith.constant 1.000000e+00 : f32
    %105 = vector.broadcast %cst_37 : f32 to vector<2x32xf32>
    %106 = arith.mulf %98, %105 : vector<2x32xf32>
    %107 = arith.subf %104, %106 : vector<2x32xf32>
    %cst_38 = arith.constant 1.000000e+00 : f32
    %108 = vector.broadcast %cst_38 : f32 to vector<2x32xf32>
    %109 = arith.cmpf ogt, %107, %108 : vector<2x32xf32>
    %110 = arith.extui %109 : vector<2x32xi1> to vector<2x32xi32>
    %111 = arith.sitofp %110 : vector<2x32xi32> to vector<2x32xf32>
    %c14 = arith.constant 14 : index
    %c0_39 = arith.constant 0 : index
    %112 = vector.load %arg7[%c14, %c0_39] : memref<16x32xf32, #tpu.memory_space<vmem>>, vector<2x32xf32>
    tpu.vector_store %arg7[%c14, %c0_39], %111 {strides = array<i32>} : memref<16x32xf32, #tpu.memory_space<vmem>>, vector<2x32xf32>,
    %c0_40 = arith.constant 0 : index
    %c0_41 = arith.constant 0 : index
    %113 = vector.load %arg7[%c0_40, %c0_41] : memref<16x32xf32, #tpu.memory_space<vmem>>, vector<16x32xf32>
    %c0_42 = arith.constant 0 : index
    %c0_43 = arith.constant 0 : index
    %114 = vector.load %arg3[%c0_42, %c0_43] : memref<32x16xf32, #tpu.memory_space<vmem>>, vector<32x16xf32>
    %cst_44 = arith.constant dense<0.000000e+00> : vector<16x16xf32>
    %115 = tpu.matmul %113, %114, %cst_44 {dimension_numbers = #tpu.dot_dimension_numbers<[1], [0], [0], [1], [0, 0, 1, 1], [], []>} : vector<16x32xf32>, vector<32x16xf32>, vector<16x16xf32> -> vector<16x16xf32>
    %c0_45 = arith.constant 0 : index
    %c0_46 = arith.constant 0 : index
    %116 = vector.load %arg4[%c0_45, %c0_46] : memref<1x16xf32, #tpu.memory_space<vmem>>, vector<1x16xf32>
    %117 = vector.broadcast %116 : vector<1x16xf32> to vector<16x16xf32>
    %118 = arith.addf %115, %117 : vector<16x16xf32>
    %cst_47 = arith.constant 0.000000e+00 : f32
    %119 = vector.broadcast %cst_47 : f32 to vector<2x16xf32>
    %cst_48 = arith.constant 0.000000e+00 : f32
    %120 = vector.broadcast %cst_48 : f32 to vector<2x16xf32>
    %121 = vector.extract_strided_slice %118 {offsets = [0, 0], sizes = [2, 16], strides = [1, 1]} : vector<16x16xf32> to vector<2x16xf32>
    %cst_49 = arith.constant 0.904837429 : f32
    %122 = vector.broadcast %cst_49 : f32 to vector<2x16xf32>
    %123 = arith.mulf %122, %119 : vector<2x16xf32>
    %124 = arith.addf %123, %121 : vector<2x16xf32>
    %cst_50 = arith.constant 1.000000e+00 : f32
    %125 = vector.broadcast %cst_50 : f32 to vector<2x16xf32>
    %126 = arith.mulf %120, %125 : vector<2x16xf32>
    %127 = arith.subf %124, %126 : vector<2x16xf32>
    %cst_51 = arith.constant 1.000000e+00 : f32
    %128 = vector.broadcast %cst_51 : f32 to vector<2x16xf32>
    %129 = arith.cmpf ogt, %127, %128 : vector<2x16xf32>
    %130 = arith.extui %129 : vector<2x16xi1> to vector<2x16xi32>
    %131 = arith.sitofp %130 : vector<2x16xi32> to vector<2x16xf32>
    %132 = vector.extract_strided_slice %118 {offsets = [2, 0], sizes = [2, 16], strides = [1, 1]} : vector<16x16xf32> to vector<2x16xf32>
    %cst_52 = arith.constant 0.904837429 : f32
    %133 = vector.broadcast %cst_52 : f32 to vector<2x16xf32>
    %134 = arith.mulf %133, %127 : vector<2x16xf32>
    %135 = arith.addf %134, %132 : vector<2x16xf32>
    %cst_53 = arith.constant 1.000000e+00 : f32
    %136 = vector.broadcast %cst_53 : f32 to vector<2x16xf32>
    %137 = arith.mulf %131, %136 : vector<2x16xf32>
    %138 = arith.subf %135, %137 : vector<2x16xf32>
    %cst_54 = arith.constant 1.000000e+00 : f32
    %139 = vector.broadcast %cst_54 : f32 to vector<2x16xf32>
    %140 = arith.cmpf ogt, %138, %139 : vector<2x16xf32>
    %141 = arith.extui %140 : vector<2x16xi1> to vector<2x16xi32>
    %142 = arith.sitofp %141 : vector<2x16xi32> to vector<2x16xf32>
    %143 = vector.extract_strided_slice %118 {offsets = [4, 0], sizes = [2, 16], strides = [1, 1]} : vector<16x16xf32> to vector<2x16xf32>
    %cst_55 = arith.constant 0.904837429 : f32
    %144 = vector.broadcast %cst_55 : f32 to vector<2x16xf32>
    %145 = arith.mulf %144, %138 : vector<2x16xf32>
    %146 = arith.addf %145, %143 : vector<2x16xf32>
    %cst_56 = arith.constant 1.000000e+00 : f32
    %147 = vector.broadcast %cst_56 : f32 to vector<2x16xf32>
    %148 = arith.mulf %142, %147 : vector<2x16xf32>
    %149 = arith.subf %146, %148 : vector<2x16xf32>
    %cst_57 = arith.constant 1.000000e+00 : f32
    %150 = vector.broadcast %cst_57 : f32 to vector<2x16xf32>
    %151 = arith.cmpf ogt, %149, %150 : vector<2x16xf32>
    %152 = arith.extui %151 : vector<2x16xi1> to vector<2x16xi32>
    %153 = arith.sitofp %152 : vector<2x16xi32> to vector<2x16xf32>
    %154 = vector.extract_strided_slice %118 {offsets = [6, 0], sizes = [2, 16], strides = [1, 1]} : vector<16x16xf32> to vector<2x16xf32>
    %cst_58 = arith.constant 0.904837429 : f32
    %155 = vector.broadcast %cst_58 : f32 to vector<2x16xf32>
    %156 = arith.mulf %155, %149 : vector<2x16xf32>
    %157 = arith.addf %156, %154 : vector<2x16xf32>
    %cst_59 = arith.constant 1.000000e+00 : f32
    %158 = vector.broadcast %cst_59 : f32 to vector<2x16xf32>
    %159 = arith.mulf %153, %158 : vector<2x16xf32>
    %160 = arith.subf %157, %159 : vector<2x16xf32>
    %cst_60 = arith.constant 1.000000e+00 : f32
    %161 = vector.broadcast %cst_60 : f32 to vector<2x16xf32>
    %162 = arith.cmpf ogt, %160, %161 : vector<2x16xf32>
    %163 = arith.extui %162 : vector<2x16xi1> to vector<2x16xi32>
    %164 = arith.sitofp %163 : vector<2x16xi32> to vector<2x16xf32>
    %165 = vector.extract_strided_slice %118 {offsets = [8, 0], sizes = [2, 16], strides = [1, 1]} : vector<16x16xf32> to vector<2x16xf32>
    %cst_61 = arith.constant 0.904837429 : f32
    %166 = vector.broadcast %cst_61 : f32 to vector<2x16xf32>
    %167 = arith.mulf %166, %160 : vector<2x16xf32>
    %168 = arith.addf %167, %165 : vector<2x16xf32>
    %cst_62 = arith.constant 1.000000e+00 : f32
    %169 = vector.broadcast %cst_62 : f32 to vector<2x16xf32>
    %170 = arith.mulf %164, %169 : vector<2x16xf32>
    %171 = arith.subf %168, %170 : vector<2x16xf32>
    %cst_63 = arith.constant 1.000000e+00 : f32
    %172 = vector.broadcast %cst_63 : f32 to vector<2x16xf32>
    %173 = arith.cmpf ogt, %171, %172 : vector<2x16xf32>
    %174 = arith.extui %173 : vector<2x16xi1> to vector<2x16xi32>
    %175 = arith.sitofp %174 : vector<2x16xi32> to vector<2x16xf32>
    %176 = vector.extract_strided_slice %118 {offsets = [10, 0], sizes = [2, 16], strides = [1, 1]} : vector<16x16xf32> to vector<2x16xf32>
    %cst_64 = arith.constant 0.904837429 : f32
    %177 = vector.broadcast %cst_64 : f32 to vector<2x16xf32>
    %178 = arith.mulf %177, %171 : vector<2x16xf32>
    %179 = arith.addf %178, %176 : vector<2x16xf32>
    %cst_65 = arith.constant 1.000000e+00 : f32
    %180 = vector.broadcast %cst_65 : f32 to vector<2x16xf32>
    %181 = arith.mulf %175, %180 : vector<2x16xf32>
    %182 = arith.subf %179, %181 : vector<2x16xf32>
    %cst_66 = arith.constant 1.000000e+00 : f32
    %183 = vector.broadcast %cst_66 : f32 to vector<2x16xf32>
    %184 = arith.cmpf ogt, %182, %183 : vector<2x16xf32>
    %185 = arith.extui %184 : vector<2x16xi1> to vector<2x16xi32>
    %186 = arith.sitofp %185 : vector<2x16xi32> to vector<2x16xf32>
    %187 = vector.extract_strided_slice %118 {offsets = [12, 0], sizes = [2, 16], strides = [1, 1]} : vector<16x16xf32> to vector<2x16xf32>
    %cst_67 = arith.constant 0.904837429 : f32
    %188 = vector.broadcast %cst_67 : f32 to vector<2x16xf32>
    %189 = arith.mulf %188, %182 : vector<2x16xf32>
    %190 = arith.addf %189, %187 : vector<2x16xf32>
    %cst_68 = arith.constant 1.000000e+00 : f32
    %191 = vector.broadcast %cst_68 : f32 to vector<2x16xf32>
    %192 = arith.mulf %186, %191 : vector<2x16xf32>
    %193 = arith.subf %190, %192 : vector<2x16xf32>
    %cst_69 = arith.constant 1.000000e+00 : f32
    %194 = vector.broadcast %cst_69 : f32 to vector<2x16xf32>
    %195 = arith.cmpf ogt, %193, %194 : vector<2x16xf32>
    %196 = arith.extui %195 : vector<2x16xi1> to vector<2x16xi32>
    %197 = arith.sitofp %196 : vector<2x16xi32> to vector<2x16xf32>
    %198 = vector.extract_strided_slice %118 {offsets = [14, 0], sizes = [2, 16], strides = [1, 1]} : vector<16x16xf32> to vector<2x16xf32>
    %cst_70 = arith.constant 0.904837429 : f32
    %199 = vector.broadcast %cst_70 : f32 to vector<2x16xf32>
    %200 = arith.mulf %199, %193 : vector<2x16xf32>
    %201 = arith.addf %200, %198 : vector<2x16xf32>
    %cst_71 = arith.constant 1.000000e+00 : f32
    %202 = vector.broadcast %cst_71 : f32 to vector<2x16xf32>
    %203 = arith.mulf %197, %202 : vector<2x16xf32>
    %204 = arith.subf %201, %203 : vector<2x16xf32>
    %cst_72 = arith.constant 1.000000e+00 : f32
    %205 = vector.broadcast %cst_72 : f32 to vector<2x16xf32>
    %206 = arith.cmpf ogt, %204, %205 : vector<2x16xf32>
    %207 = arith.extui %206 : vector<2x16xi1> to vector<2x16xi32>
    %208 = arith.sitofp %207 : vector<2x16xi32> to vector<2x16xf32>
    %209 = tpu.concatenate %127, %138, %149, %160, %171, %182, %193, %204 in 1 : vector<2x16xf32>, vector<2x16xf32>, vector<2x16xf32>, vector<2x16xf32>, vector<2x16xf32>, vector<2x16xf32>, vector<2x16xf32>, vector<2x16xf32> -> vector<2x128xf32>
    %c0_73 = arith.constant 0 : index
    %c0_74 = arith.constant 0 : index
    %210 = vector.load %arg5[%c0_73, %c0_74] : memref<2x128xf32, #tpu.memory_space<vmem>>, vector<2x128xf32>
    tpu.vector_store %arg5[%c0_73, %c0_74], %209 {strides = array<i32>} : memref<2x128xf32, #tpu.memory_space<vmem>>, vector<2x128xf32>,
    %211 = tpu.concatenate %131, %142, %153, %164, %175, %186, %197, %208 in 1 : vector<2x16xf32>, vector<2x16xf32>, vector<2x16xf32>, vector<2x16xf32>, vector<2x16xf32>, vector<2x16xf32>, vector<2x16xf32>, vector<2x16xf32> -> vector<2x128xf32>
    %c0_75 = arith.constant 0 : index
    %c0_76 = arith.constant 0 : index
    %212 = vector.load %arg6[%c0_75, %c0_76] : memref<2x128xf32, #tpu.memory_space<vmem>>, vector<2x128xf32>
    tpu.vector_store %arg6[%c0_75, %c0_76], %211 {strides = array<i32>} : memref<2x128xf32, #tpu.memory_space<vmem>>, vector<2x128xf32>,
    return
  }
}

</mosaic_0001>

<llo_original>
// kernel: tpu_custom_call.1
$region0: #{tpu_custom_call.1}
  #allocation0 [shape = 'u32[]', space=smem, size = 0x4, offset = 0x4, fixed_abs, tag = 'smem constant byte address 0x4 - core index']
  #allocation1 [shape = 'u32[72,128]{1,0:T(1,128)}', space=vmem, size = 0x9000, scoped, tag = 'internal scratch']
  #allocation2 [shape = 'f32[16,32]{1,0:T(8,128)}', space=vmem, size = 0x2000, scoped, tag = 'scratch operand']
  %s0 = inlined_call_operand.vmem [shape: f32[16,256], index: 0, kind: input, shape index: {}]
  %s1 = inlined_call_operand.vmem [shape: f32[256,32], index: 1, kind: input, shape index: {}]
  %s2 = inlined_call_operand.vmem [shape: f32[1,32], index: 2, kind: input, shape index: {}]
  %s3 = inlined_call_operand.vmem [shape: f32[32,16], index: 3, kind: input, shape index: {}]
  %s4 = inlined_call_operand.vmem [shape: f32[1,16], index: 4, kind: input, shape index: {}]
  %s5 = inlined_call_operand.hbm [shape: f32[2,128], index: 5, kind: output, shape index: {0}]
  %s6 = inlined_call_operand.hbm [shape: f32[2,128], index: 6, kind: output, shape index: {1}]
  %7 = xla_tuple %s5, %s6
  %s8 = sld [smem:[#allocation0]]
  $region38: #{tpu_custom_call.1} parent=0
    _
  %s10 = ssub.s32 1, %s8
  %s11 = scalar_select 0, %s10, %s8
  $region1: #{tpu_custom_call.1} parent=0
    #allocation3 [shape = 'u8[1024]{0}', space=vmem, size = 0x400, scoped, tag = 'output window, operand 0, single buffered']
    #allocation4 [shape = 's32[1]{0}', space=sflag, size = 0x4, scoped, tag = 'scoped memory for tpu_custom_call.1']
    #allocation5 [shape = 'u8[1024]{0}', space=vmem, size = 0x400, scoped, tag = 'output window, operand 1, single buffered']
    #allocation6 [shape = 's32[1]{0}', space=sflag, size = 0x4, scoped, tag = 'scoped memory for tpu_custom_call.1']
    %12 = vsyncpa [#allocation4], 0
    %13 = vsyncpa [#allocation6], 0
    // Predicated region
    $region2: #{tpu_custom_call.1} parent=1 // pred_check
      _
    $region3: #{tpu_custom_call.1} parent=1 // pred_check_branch
      %15 = sbr.rel (0) target = $region5
    $region4: #{tpu_custom_call.1} parent=1 // pred_region
      _
    $region5: #{tpu_custom_call.1} parent=1 // pred_fallthru
      _
    // Predicated region
    $region6: #{tpu_custom_call.1} parent=1 // pred_check
      _
    $region7: #{tpu_custom_call.1} parent=1 // pred_check_branch
      %17 = sbr.rel (0) target = $region9
    $region8: #{tpu_custom_call.1} parent=1 // pred_region
      _
    $region9: #{tpu_custom_call.1} parent=1 // pred_fallthru
      _
    // Predicated region
    $region10: #{tpu_custom_call.1} parent=1 // pred_check
      _
    $region11: #{tpu_custom_call.1} parent=1 // pred_check_branch
      %19 = sbr.rel (0) target = $region13
    $region12: #{tpu_custom_call.1} parent=1 // pred_region
      _
    $region13: #{tpu_custom_call.1} parent=1 // pred_fallthru
      _
    // Predicated region
    $region14: #{tpu_custom_call.1} parent=1 // pred_check
      _
    $region15: #{tpu_custom_call.1} parent=1 // pred_check_branch
      %21 = sbr.rel (0) target = $region17
    $region16: #{tpu_custom_call.1} parent=1 // pred_region
      _
    $region17: #{tpu_custom_call.1} parent=1 // pred_fallthru
      _
    // Predicated region
    $region18: #{tpu_custom_call.1} parent=1 // pred_check
      _
    $region19: #{tpu_custom_call.1} parent=1 // pred_check_branch
      %23 = sbr.rel (0) target = $region21
    $region20: #{tpu_custom_call.1} parent=1 // pred_region
      _
    $region21: #{tpu_custom_call.1} parent=1 // pred_fallthru
      _
    %v24 = vld [vmem:[%s0] sm:$0xff]
    %v25 = vld [vmem:[%s0 + $0x8] sm:$0xff]
    %v26 = vld [vmem:[%s0 + $0x10] sm:$0xff]
    %v27 = vld [vmem:[%s0 + $0x18] sm:$0xff]
    %v28 = vld [vmem:[%s1] sm:$0xff]
    %v29 = vld [vmem:[%s1 + $0x8] sm:$0xff]
    %v30 = vld [vmem:[%s1 + $0x10] sm:$0xff]
    %v31 = vld [vmem:[%s1 + $0x18] sm:$0xff]
    %v32 = vld [vmem:[%s1 + $0x20] sm:$0xff]
    %v33 = vld [vmem:[%s1 + $0x28] sm:$0xff]
    %v34 = vld [vmem:[%s1 + $0x30] sm:$0xff]
    %v35 = vld [vmem:[%s1 + $0x38] sm:$0xff]
    %v36 = vld [vmem:[%s1 + $0x40] sm:$0xff]
    %v37 = vld [vmem:[%s1 + $0x48] sm:$0xff]
    %v38 = vld [vmem:[%s1 + $0x50] sm:$0xff]
    %v39 = vld [vmem:[%s1 + $0x58] sm:$0xff]
    %v40 = vld [vmem:[%s1 + $0x60] sm:$0xff]
    %v41 = vld [vmem:[%s1 + $0x68] sm:$0xff]
    %v42 = vld [vmem:[%s1 + $0x70] sm:$0xff]
    %v43 = vld [vmem:[%s1 + $0x78] sm:$0xff]
    %v44 = vld [vmem:[%s1 + $0x80] sm:$0xff]
    %v45 = vld [vmem:[%s1 + $0x88] sm:$0xff]
    %v46 = vld [vmem:[%s1 + $0x90] sm:$0xff]
    %v47 = vld [vmem:[%s1 + $0x98] sm:$0xff]
    %v48 = vld [vmem:[%s1 + $0xa0] sm:$0xff]
    %v49 = vld [vmem:[%s1 + $0xa8] sm:$0xff]
    %v50 = vld [vmem:[%s1 + $0xb0] sm:$0xff]
    %v51 = vld [vmem:[%s1 + $0xb8] sm:$0xff]
    %v52 = vld [vmem:[%s1 + $0xc0] sm:$0xff]
    %v53 = vld [vmem:[%s1 + $0xc8] sm:$0xff]
    %v54 = vld [vmem:[%s1 + $0xd0] sm:$0xff]
    %v55 = vld [vmem:[%s1 + $0xd8] sm:$0xff]
    %v56 = vld [vmem:[%s1 + $0xe0] sm:$0xff]
    %v57 = vld [vmem:[%s1 + $0xe8] sm:$0xff]
    %v58 = vld [vmem:[%s1 + $0xf0] sm:$0xff]
    %v59 = vld [vmem:[%s1 + $0xf8] sm:$0xff]
    %v60 = vld [vmem:[%s2] sm:$0x1]
    %v62 = vperm.slane %v60, 0
    %64 = vmatpush.msra.mxu0 %v43
    %65 = vmatpush.msra.mxu0 %v42
    %66 = vmatpush.msra.mxu0 %v41
    %67 = vmatpush.msra.mxu0 %v40
    %68 = vmatpush.msra.mxu0 %v39
    %69 = vmatpush.msra.mxu0 %v38
    %70 = vmatpush.msra.mxu0 %v37
    %71 = vmatpush.msra.mxu0 %v36
    %72 = vmatpush.msra.mxu0 %v35
    %73 = vmatpush.msra.mxu0 %v34
    %74 = vmatpush.msra.mxu0 %v33
    %75 = vmatpush.msra.mxu0 %v32
    %76 = vmatpush.msra.mxu0 %v31
    %77 = vmatpush.msra.mxu0 %v30
    %78 = vmatpush.msra.mxu0 %v29
    %79 = vmatpush.msra.mxu0 %v28
    %80 = vmatmul.f32.gmra.mxu0 %v24
    %v81 = vpop.f32.mrf.mxu0
    %v82 = vadd.f32 %v62, %v81
    %83 = vmatmul.f32.gmra.mxu0 %v26
    %v84 = vpop.f32.mrf.mxu0
    %v85 = vadd.f32 %v62, %v84
    %86 = vdwg.mxu0
    %87 = vmatpush.msra.mxu0 %v59
    %88 = vmatpush.msra.mxu0 %v58
    %89 = vmatpush.msra.mxu0 %v57
    %90 = vmatpush.msra.mxu0 %v56
    %91 = vmatpush.msra.mxu0 %v55
    %92 = vmatpush.msra.mxu0 %v54
    %93 = vmatpush.msra.mxu0 %v53
    %94 = vmatpush.msra.mxu0 %v52
    %95 = vmatpush.msra.mxu0 %v51
    %96 = vmatpush.msra.mxu0 %v50
    %97 = vmatpush.msra.mxu0 %v49
    %98 = vmatpush.msra.mxu0 %v48
    %99 = vmatpush.msra.mxu0 %v47
    %100 = vmatpush.msra.mxu0 %v46
    %101 = vmatpush.msra.mxu0 %v45
    %102 = vmatpush.msra.mxu0 %v44
    %103 = vmatmul.f32.gmra.mxu0 %v25
    %v104 = vpop.f32.mrf.mxu0
    %v105 = vadd.f32 %v82, %v104
    %106 = vmatmul.f32.gmra.mxu0 %v27
    %v107 = vpop.f32.mrf.mxu0
    %v108 = vadd.f32 %v85, %v107
    %109 = vdwg.mxu0
    %v110 = vadd.f32 %v105, 0.0
    %v111 = vadd.f32 %v108, 0.0
    %vm112 = vcmp.gt.f32.partialorder %v110, 1.0
    %vm113 = vcmp.gt.f32.partialorder %v111, 1.0
    %v114 = vsel %vm112, 1, 0
    %v115 = vsel %vm113, 1, 0
    %v116 = vcvt.s32.f32 %v114
    %v117 = vcvt.s32.f32 %v115
    %v120 = vrot.slane %v117, 7
    %vm121 = vcmask 1041409
    %v122 = vsel %vm121, %v120, %v116
    %vm124 = vcmask 254976
    %125 = vst.msk [vmem:[#allocation2] sm:$0x3] %vm124, %v122
    %v126 = vmul.f32 %v110, 0.9048374
    %v127 = vmul.f32 %v111, 0.9048374
    %v130 = vrot.slane %v105, 1
    %v131 = vrot.slane %v108, 1
    %v134 = vadd.f32 %v126, %v130
    %v135 = vadd.f32 %v127, %v131
    %v136 = vsub.f32 %v134, %v116
    %v137 = vsub.f32 %v135, %v117
    %vm138 = vcmp.gt.f32.partialorder %v136, 1.0
    %vm139 = vcmp.gt.f32.partialorder %v137, 1.0
    %v140 = vsel %vm138, 1, 0
    %v141 = vsel %vm139, 1, 0
    %v142 = vcvt.s32.f32 %v140
    %v143 = vcvt.s32.f32 %v141
    %v146 = vrot.slane %v143, 7
    %v147 = vsel %vm121, %v146, %v142
    %149 = vst.msk [vmem:[#allocation2 + $0x2] sm:$0x3] %vm124, %v147
    %v150 = vmul.f32 %v136, 0.9048374
    %v151 = vmul.f32 %v137, 0.9048374
    %v152 = vrot.slane %v105, 2
    %v153 = vrot.slane %v108, 2
    %v156 = vadd.f32 %v150, %v152
    %v157 = vadd.f32 %v151, %v153
    %v158 = vsub.f32 %v156, %v142
    %v159 = vsub.f32 %v157, %v143
    %vm160 = vcmp.gt.f32.partialorder %v158, 1.0
    %vm161 = vcmp.gt.f32.partialorder %v159, 1.0
    %v162 = vsel %vm160, 1, 0
    %v163 = vsel %vm161, 1, 0
    %v164 = vcvt.s32.f32 %v162
    %v165 = vcvt.s32.f32 %v163
    %v168 = vrot.slane %v165, 7
    %v169 = vsel %vm121, %v168, %v164
    %171 = vst.msk [vmem:[#allocation2 + $0x4] sm:$0x3] %vm124, %v169
    %v172 = vmul.f32 %v158, 0.9048374
    %v173 = vmul.f32 %v159, 0.9048374
    %v174 = vrot.slane %v105, 3
    %v175 = vrot.slane %v108, 3
    %v178 = vadd.f32 %v172, %v174
    %v179 = vadd.f32 %v173, %v175
    %v180 = vsub.f32 %v178, %v164
    %v181 = vsub.f32 %v179, %v165
    %vm182 = vcmp.gt.f32.partialorder %v180, 1.0
    %vm183 = vcmp.gt.f32.partialorder %v181, 1.0
    %v184 = vsel %vm182, 1, 0
    %v185 = vsel %vm183, 1, 0
    %v186 = vcvt.s32.f32 %v184
    %v187 = vcvt.s32.f32 %v185
    %v190 = vrot.slane %v187, 7
    %v191 = vsel %vm121, %v190, %v186
    %193 = vst.msk [vmem:[#allocation2 + $0x6] sm:$0x3] %vm124, %v191
    %v194 = vmul.f32 %v180, 0.9048374
    %v195 = vmul.f32 %v181, 0.9048374
    %v196 = vrot.slane %v105, 4
    %v197 = vrot.slane %v108, 4
    %v200 = vadd.f32 %v194, %v196
    %v201 = vadd.f32 %v195, %v197
    %v202 = vsub.f32 %v200, %v186
    %v203 = vsub.f32 %v201, %v187
    %vm204 = vcmp.gt.f32.partialorder %v202, 1.0
    %vm205 = vcmp.gt.f32.partialorder %v203, 1.0
    %v206 = vsel %vm204, 1, 0
    %v207 = vsel %vm205, 1, 0
    %v208 = vcvt.s32.f32 %v206
    %v209 = vcvt.s32.f32 %v207
    %v212 = vrot.slane %v209, 7
    %v213 = vsel %vm121, %v212, %v208
    %215 = vst.msk [vmem:[#allocation2 + $0x8] sm:$0x3] %vm124, %v213
    %v216 = vmul.f32 %v202, 0.9048374
    %v217 = vmul.f32 %v203, 0.9048374
    %v218 = vrot.slane %v105, 5
    %v219 = vrot.slane %v108, 5
    %v222 = vadd.f32 %v216, %v218
    %v223 = vadd.f32 %v217, %v219
    %v224 = vsub.f32 %v222, %v208
    %v225 = vsub.f32 %v223, %v209
    %vm226 = vcmp.gt.f32.partialorder %v224, 1.0
    %vm227 = vcmp.gt.f32.partialorder %v225, 1.0
    %v228 = vsel %vm226, 1, 0
    %v229 = vsel %vm227, 1, 0
    %v230 = vcvt.s32.f32 %v228
    %v231 = vcvt.s32.f32 %v229
    %v234 = vrot.slane %v231, 7
    %v235 = vsel %vm121, %v234, %v230
    %237 = vst.msk [vmem:[#allocation2 + $0xa] sm:$0x3] %vm124, %v235
    %v238 = vmul.f32 %v224, 0.9048374
    %v239 = vmul.f32 %v225, 0.9048374
    %v240 = vrot.slane %v105, 6
    %v241 = vrot.slane %v108, 6
    %v244 = vadd.f32 %v238, %v240
    %v245 = vadd.f32 %v239, %v241
    %v246 = vsub.f32 %v244, %v230
    %v247 = vsub.f32 %v245, %v231
    %vm248 = vcmp.gt.f32.partialorder %v246, 1.0
    %vm249 = vcmp.gt.f32.partialorder %v247, 1.0
    %v250 = vsel %vm248, 1, 0
    %v251 = vsel %vm249, 1, 0
    %v252 = vcvt.s32.f32 %v250
    %v253 = vcvt.s32.f32 %v251
    %v256 = vrot.slane %v253, 7
    %v257 = vsel %vm121, %v256, %v252
    %259 = vst.msk [vmem:[#allocation2 + $0xc] sm:$0x3] %vm124, %v257
    %v260 = vmul.f32 %v246, 0.9048374
    %v261 = vmul.f32 %v247, 0.9048374
    %v262 = vrot.slane %v105, 7
    %v263 = vrot.slane %v108, 7
    %v266 = vadd.f32 %v260, %v262
    %v267 = vadd.f32 %v261, %v263
    %v268 = vsub.f32 %v266, %v252
    %v269 = vsub.f32 %v267, %v253
    %vm270 = vcmp.gt.f32.partialorder %v268, 1.0
    %vm271 = vcmp.gt.f32.partialorder %v269, 1.0
    %v272 = vsel %vm270, 1, 0
    %v273 = vsel %vm271, 1, 0
    %v274 = vcvt.s32.f32 %v272
    %v275 = vcvt.s32.f32 %v273
    %v278 = vrot.slane %v275, 7
    %v279 = vsel %vm121, %v278, %v274
    %281 = vst.msk [vmem:[#allocation2 + $0xe] sm:$0x3] %vm124, %v279
    %v282 = vld [vmem:[#allocation2] sm:$0xff]
    %v283 = vld [vmem:[#allocation2 + $0x8] sm:$0xff]
    %v284 = vld [vmem:[%s3] sm:$0xff]
    %v285 = vld [vmem:[%s3 + $0x8] sm:$0xff]
    %v286 = vld [vmem:[%s3 + $0x10] sm:$0xff]
    %v287 = vld [vmem:[%s3 + $0x18] sm:$0xff]
    %v288 = vld [vmem:[%s4] sm:$0x1]
    %v290 = vperm.slane %v288, 0
    %vm292 = vcmask 261120
    %v294 = vsel %vm292, %v282, 0
    %v297 = vsel %vm292, %v283, 0
    %299 = vmatpush.msra.mxu0 0.0
    %300 = vmatpush.msra.mxu0 0.0
    %301 = vmatpush.msra.mxu0 0.0
    %302 = vmatpush.msra.mxu0 0.0
    %303 = vmatpush.msra.mxu0 0.0
    %304 = vmatpush.msra.mxu0 0.0
    %305 = vmatpush.msra.mxu0 0.0
    %306 = vmatpush.msra.mxu0 0.0
    %307 = vmatpush.msra.mxu0 0.0
    %308 = vmatpush.msra.mxu0 0.0
    %309 = vmatpush.msra.mxu0 0.0
    %310 = vmatpush.msra.mxu0 0.0
    %311 = vmatpush.msra.mxu0 %v287
    %312 = vmatpush.msra.mxu0 %v286
    %313 = vmatpush.msra.mxu0 %v285
    %314 = vmatpush.msra.mxu0 %v284
    %315 = vmatmul.f32.gmra.mxu0 %v294
    %v316 = vpop.f32.mrf.mxu0
    %v317 = vadd.f32 %v290, %v316
    %318 = vmatmul.f32.gmra.mxu0 %v297
    %v319 = vpop.f32.mrf.mxu0
    %v320 = vadd.f32 %v290, %v319
    %321 = vdwg.mxu0
    %v322 = vadd.f32 %v317, 0.0
    %vm323 = vcmp.gt.f32.partialorder %v322, 1.0
    %v324 = vsel %vm323, 1, 0
    %v325 = vcvt.s32.f32 %v324
    %v326 = vmul.f32 %v322, 0.9048374
    %v328 = vrot.slane %v317, 2
    %v330 = vadd.f32 %v326, %v328
    %v331 = vsub.f32 %v330, %v325
    %vm332 = vcmp.gt.f32.partialorder %v331, 1.0
    %v333 = vsel %vm332, 1, 0
    %v334 = vcvt.s32.f32 %v333
    %v335 = vmul.f32 %v331, 0.9048374
    %v336 = vrot.slane %v317, 4
    %v338 = vadd.f32 %v335, %v336
    %v339 = vsub.f32 %v338, %v334
    %vm340 = vcmp.gt.f32.partialorder %v339, 1.0
    %v341 = vsel %vm340, 1, 0
    %v342 = vcvt.s32.f32 %v341
    %v343 = vmul.f32 %v339, 0.9048374
    %v344 = vrot.slane %v317, 6
    %v346 = vadd.f32 %v343, %v344
    %v347 = vsub.f32 %v346, %v342
    %vm348 = vcmp.gt.f32.partialorder %v347, 1.0
    %v349 = vsel %vm348, 1, 0
    %v350 = vcvt.s32.f32 %v349
    %v351 = vmul.f32 %v347, 0.9048374
    %v352 = vadd.f32 %v351, %v320
    %v353 = vsub.f32 %v352, %v350
    %vm354 = vcmp.gt.f32.partialorder %v353, 1.0
    %v355 = vsel %vm354, 1, 0
    %v356 = vcvt.s32.f32 %v355
    %v357 = vmul.f32 %v353, 0.9048374
    %v359 = vrot.slane %v320, 2
    %v361 = vadd.f32 %v357, %v359
    %v362 = vsub.f32 %v361, %v356
    %vm363 = vcmp.gt.f32.partialorder %v362, 1.0
    %v364 = vsel %vm363, 1, 0
    %v365 = vcvt.s32.f32 %v364
    %v366 = vmul.f32 %v362, 0.9048374
    %v367 = vrot.slane %v320, 4
    %v369 = vadd.f32 %v366, %v367
    %v370 = vsub.f32 %v369, %v365
    %vm371 = vcmp.gt.f32.partialorder %v370, 1.0
    %v372 = vsel %vm371, 1, 0
    %v373 = vcvt.s32.f32 %v372
    %v374 = vmul.f32 %v370, 0.9048374
    %v375 = vrot.slane %v320, 6
    %v377 = vadd.f32 %v374, %v375
    %v378 = vsub.f32 %v377, %v373
    %vm379 = vcmp.gt.f32.partialorder %v378, 1.0
    %v380 = vsel %vm379, 1, 0
    %v381 = vcvt.s32.f32 %v380
    %383 = vrot.lane.b32.xlu0 %v331, 16
    %v384 = vpop.permute.xlu0 %383
    %387 = vrot.lane.b32.xlu0 %v339, 32
    %v388 = vpop.permute.xlu0 %387
    %391 = vrot.lane.b32.xlu0 %v347, 48
    %v392 = vpop.permute.xlu0 %391
    %395 = vrot.lane.b32.xlu0 %v353, 64
    %v396 = vpop.permute.xlu0 %395
    %399 = vrot.lane.b32.xlu0 %v362, 80
    %v400 = vpop.permute.xlu0 %399
    %403 = vrot.lane.b32.xlu0 %v370, 96
    %v404 = vpop.permute.xlu0 %403
    %407 = vrot.lane.b32.xlu0 %v378, 112
    %v408 = vpop.permute.xlu0 %407
    %vm410 = vcmask 130048
    %v411 = vsel %vm410, %v322, %v384
    %v412 = vsel %vm292, %v411, %v388
    %vm413 = vcmask 392192
    %v414 = vsel %vm413, %v412, %v392
    %vm415 = vcmask 523264
    %v416 = vsel %vm415, %v414, %v396
    %vm417 = vcmask 654336
    %v418 = vsel %vm417, %v416, %v400
    %vm419 = vcmask 785408
    %v420 = vsel %vm419, %v418, %v404
    %vm421 = vcmask 916480
    %v422 = vsel %vm421, %v420, %v408
    %423 = vst [vmem:[#allocation3] sm:$0x3] %v422
    %425 = vrot.lane.b32.xlu0 %v334, 16
    %v426 = vpop.permute.xlu0 %425
    %429 = vrot.lane.b32.xlu0 %v342, 32
    %v430 = vpop.permute.xlu0 %429
    %433 = vrot.lane.b32.xlu0 %v350, 48
    %v434 = vpop.permute.xlu0 %433
    %437 = vrot.lane.b32.xlu0 %v356, 64
    %v438 = vpop.permute.xlu0 %437
    %441 = vrot.lane.b32.xlu0 %v365, 80
    %v442 = vpop.permute.xlu0 %441
    %445 = vrot.lane.b32.xlu0 %v373, 96
    %v446 = vpop.permute.xlu0 %445
    %449 = vrot.lane.b32.xlu0 %v381, 112
    %v450 = vpop.permute.xlu0 %449
    %v452 = vsel %vm410, %v325, %v426
    %v453 = vsel %vm292, %v452, %v430
    %v454 = vsel %vm413, %v453, %v434
    %v455 = vsel %vm415, %v454, %v438
    %v456 = vsel %vm417, %v455, %v442
    %v457 = vsel %vm419, %v456, %v446
    %v458 = vsel %vm421, %v457, %v450
    %459 = vst [vmem:[#allocation5] sm:$0x3] %v458
    // Predicated region
    $region22: #{tpu_custom_call.1} parent=1 // pred_check
      _
    $region23: #{tpu_custom_call.1} parent=1 // pred_check_branch
      %461 = sbr.rel (0) target = $region25
    $region24: #{tpu_custom_call.1} parent=1 // pred_region
      %463 = vsyncadd [#allocation4], 0
      %s465 = sshll.u32 [#allocation3], 4
      %s466 = int_to_ptr.vmem [resolvable:$true] %s465
      %s467 = sshll.u32 %s5, 4
      %s468 = int_to_ptr.hbm [resolvable:$true] %s467
      %470 = dma.vmem_to_hbm [thread:$0]  %s466, 32, %s468, [#allocation4]
    $region25: #{tpu_custom_call.1} parent=1 // pred_fallthru
      _
    // Predicated region
    $region26: #{tpu_custom_call.1} parent=1 // pred_check
      _
    $region27: #{tpu_custom_call.1} parent=1 // pred_check_branch
      %472 = sbr.rel (0) target = $region29
    $region28: #{tpu_custom_call.1} parent=1 // pred_region
      %474 = vsyncadd [#allocation6], 0
      %s476 = sshll.u32 [#allocation5], 4
      %s477 = int_to_ptr.vmem [resolvable:$true] %s476
      %s478 = sshll.u32 %s6, 4
      %s479 = int_to_ptr.hbm [resolvable:$true] %s478
      %481 = dma.vmem_to_hbm [thread:$0]  %s477, 32, %s479, [#allocation6]
    $region29: #{tpu_custom_call.1} parent=1 // pred_fallthru
      _
    // Predicated region
    $region30: #{tpu_custom_call.1} parent=1 // pred_check
      _
    $region31: #{tpu_custom_call.1} parent=1 // pred_check_branch
      %483 = sbr.rel (0) target = $region33
    $region32: #{tpu_custom_call.1} parent=1 // pred_region
      %485 = dma.done [#allocation4], 32
    $region33: #{tpu_custom_call.1} parent=1 // pred_fallthru
      _
    // Predicated region
    $region34: #{tpu_custom_call.1} parent=1 // pred_check
      _
    $region35: #{tpu_custom_call.1} parent=1 // pred_check_branch
      %487 = sbr.rel (0) target = $region37
    $region36: #{tpu_custom_call.1} parent=1 // pred_region
      %489 = dma.done [#allocation6], 32
    $region37: #{tpu_custom_call.1} parent=1 // pred_fallthru
      _
    %490 = vsyncpa [#allocation4], 1
    %491 = vsyncpa [#allocation6], 1

</llo_original>
